<compile_context>
chip_gen: v5e
topology: v5e:2x2
jax: 0.10.0
libtpu: 0.0.40
codegen_flags: <defaults>
</compile_context>

<pallas_src>
import jax
import jax.numpy as jnp
from jax import lax
from jax.experimental import pallas as pl
from jax.experimental.pallas import tpu as pltpu

# ----------------------------- configuration --------------------------------
B, T = 2, 8            # batch, sequence length
N_UNITS = 32           # input embedding dim (n_units)
D2 = N_UNITS // 2      # Conv1d output channels (16)
D4 = N_UNITS // 4      # Linear hidden width (8)
KSIZE = 7              # Conv1d kernel size
PAD = 3                # Conv1d padding
BT = B * T

# Packed-weight-slab row offsets (all multiples of 16 -> bf16 sublane aligned).
W2_ROW = KSIZE * N_UNITS          # 224
W3_ROW = W2_ROW + D2              # 240  (D2 == 16 keeps this 16-aligned)
W_ROWS = 256                      # padded slab height
ACC_ROWS = BT + 2 * PAD           # padded conv accumulator height

assert T & (T - 1) == 0, "T must be a power of two (in-kernel mask uses `& (T-1)`)"
assert D2 % 16 == 0 and W2_ROW % 16 == 0 and W3_ROW % 16 == 0


# --------------------------------- kernel ------------------------------------
def scd_kernel(x_ref, w_ref, b_ref, out_ref, acc_ref):
    # x_ref:   (BT, N_UNITS) f32   batch folded into sublanes
    # w_ref:   (W_ROWS, 32)  bf16  rows [tap*32:(tap+1)*32, :16] = conv tap `tap`
    #                              rows [224:240, :8] = W2, rows [240:248, :1] = W3
    # b_ref:   (3, 32)       f32   row0[:16]=conv bias, row1[:8]=b2, row2[:1]=b3
    # out_ref: (BT, 1)       f32
    # acc_ref: (ACC_ROWS, D2) f32  VMEM scratch: conv accumulator padded by PAD
    #                              rows each side so every tap's contribution is
    #                              placed by an offset store (no concat, no
    #                              shifted copies of the activations).
    xb = x_ref[...].astype(jnp.bfloat16)                        # MXU operands in bf16

    # Within-sequence time index of every *source* row (T is a power of two).
    t_src = lax.broadcasted_iota(jnp.int32, (BT, D2), 0) & (T - 1)

    acc_ref[...] = jnp.zeros_like(acc_ref)
    for tap in range(KSIZE):
        off = tap - PAD                                         # out[t] += x[t+off] @ W[tap]
        w_tap = w_ref[tap * N_UNITS:(tap + 1) * N_UNITS, 0:D2]  # (D, D2) bf16
        y = jnp.dot(xb, w_tap, preferred_element_type=jnp.float32)   # (BT, D2) f32
        # Zero source rows whose destination t = t_src - off falls outside the
        # same sequence (this also kills cross-batch leakage of the flat layout).
        if off > 0:
            y = jnp.where(t_src >= off, y, 0.0)
        elif off < 0:
            y = jnp.where(t_src < T + off, y, 0.0)
        # Source row s contributes to output row s - off, i.e. accumulator row
        # s + (PAD - off): a simple offset read-modify-write store.
        acc_ref[pl.ds(PAD - off, BT), :] += y

    conv = acc_ref[pl.ds(PAD, BT), :] + b_ref[0:1, 0:D2]        # (BT, D2) f32
    h = jnp.tanh(conv)                                          # EUP in f32 (v5e-safe)

    h2 = jnp.tanh(
        jnp.dot(h.astype(jnp.bfloat16), w_ref[W2_ROW:W2_ROW + D2, 0:D4],
                preferred_element_type=jnp.float32) + b_ref[1:2, 0:D4])
    # TODO(synk): F.dropout(p=0.1) is identity in inference mode (training=False).
    logit = (jnp.dot(h2.astype(jnp.bfloat16), w_ref[W3_ROW:W3_ROW + D4, 0:1],
                     preferred_element_type=jnp.float32) + b_ref[2:3, 0:1])
    out_ref[...] = logit                                        # (BT, 1)


# --------------------------------- wrapper ------------------------------------
def scd_forward(xs, params):
    """StateChangeDetector.forward: xs (B, T, n_units) -> (B, T) logits."""
    b, t, d = xs.shape
    x_flat = xs.reshape(b * t, d)

    # Host-side packing (free layout plumbing): one bf16 weight slab + one tiny
    # f32 bias slab -> 3 input DMAs total.
    w_slab = jnp.zeros((W_ROWS, N_UNITS), jnp.float32)
    w_slab = w_slab.at[0:KSIZE * d, 0:D2].set(params["wc"].reshape(KSIZE * d, D2))
    w_slab = w_slab.at[W2_ROW:W2_ROW + D2, 0:D4].set(params["sw2"])
    w_slab = w_slab.at[W3_ROW:W3_ROW + D4, 0:1].set(params["sw3"])
    w_slab = w_slab.astype(jnp.bfloat16)

    b_slab = jnp.zeros((3, N_UNITS), jnp.float32)
    b_slab = b_slab.at[0, 0:D2].set(params["bc"])
    b_slab = b_slab.at[1, 0:D4].set(params["sb2"])
    b_slab = b_slab.at[2, 0:1].set(params["sb3"])

    logits = pl.pallas_call(
        scd_kernel,
        out_shape=jax.ShapeDtypeStruct((b * t, 1), jnp.float32),
        in_specs=[
            pl.BlockSpec((b * t, d), lambda: (0, 0)),
            pl.BlockSpec((W_ROWS, N_UNITS), lambda: (0, 0)),
            pl.BlockSpec((3, N_UNITS), lambda: (0, 0)),
        ],
        out_specs=pl.BlockSpec((b * t, 1), lambda: (0, 0)),
        scratch_shapes=[pltpu.VMEM((ACC_ROWS, D2), jnp.float32)],
    )(x_flat, w_slab, b_slab)
    return logits.reshape(b, t)


# ------------------------------ parameter init --------------------------------
def init_params(key):
    ks = jax.random.split(key, 6)

    def nrm(k, shape, scale=0.1):
        return jax.random.normal(k, shape, jnp.float32) * scale

    return {
        # Conv1d weight stored per-tap, already transposed:
        #   wc[k] == torch_conv.weight[:, :, k].T   with shape (N_UNITS, D2)
        "wc": nrm(ks[0], (KSIZE, N_UNITS, D2)),
        "bc": nrm(ks[1], (D2,), 0.01),
        "sw2": nrm(ks[2], (D2, D4)),
        "sb2": nrm(ks[3], (D4,), 0.01),
        "sw3": nrm(ks[4], (D4, 1)),
        "sb3": nrm(ks[5], (1,), 0.01),
    }


# ------------------------------ pure-JAX reference ----------------------------
def ref_scd(xs, p):
    """Reference of the PyTorch forward (dropout = identity in eval mode)."""
    hp = jax.lax.Precision.HIGHEST
    b, t, _ = xs.shape
    padded = jnp.pad(xs, ((0, 0), (PAD, PAD), (0, 0)))
    out = jnp.zeros((b, t, D2), jnp.float32) + p["bc"]
    for tap in range(KSIZE):
        out = out + jnp.einsum("btd,de->bte", padded[:, tap:tap + t, :],
                               p["wc"][tap], precision=hp)
    h = jnp.tanh(out)
    h = jnp.tanh(jnp.einsum("btd,de->bte", h, p["sw2"], precision=hp) + p["sb2"])
    return (jnp.einsum("btd,de->bte", h, p["sw3"], precision=hp) + p["sb3"])[..., 0]


# ----------------------------------- main --------------------------------------
if __name__ == "__main__":
    key = jax.random.PRNGKey(0)
    kx, kp = jax.random.split(key)
    xs = jax.random.normal(kx, (B, T, N_UNITS), jnp.float32)
    params = init_params(kp)

    logits = jax.jit(scd_forward)(xs, params)
    jax.block_until_ready(logits)

    ref = ref_scd(xs, params)
    assert logits.shape == (B, T)
    assert bool(jnp.all(jnp.isfinite(logits)))
    err = float(jnp.max(jnp.abs(logits - ref)))
    # bf16 MXU operands vs f32 reference: review suggested ~1e-2; 2e-2 leaves margin.
    assert err < 2e-2, f"max abs error {err}"
    print("KERNEL_OK")
</pallas_src>

<mosaic_0001>
module attributes {stable_mosaic.version = 11 : i64} {
  func.func @scd_kernel(%arg0: memref<16x32xf32, #tpu.memory_space<vmem>>, %arg1: memref<256x32xbf16, #tpu.memory_space<vmem>>, %arg2: memref<3x32xf32, #tpu.memory_space<vmem>>, %arg3: memref<16x1xf32, #tpu.memory_space<vmem>>, %arg4: memref<22x16xf32, #tpu.memory_space<vmem>>) attributes {dimension_semantics = [], scalar_prefetch = 0 : i64, scratch_operands = 1 : i64, tpu.core_type = #tpu.core_type<tc>} {
    %c0 = arith.constant 0 : index
    %c0_0 = arith.constant 0 : index
    %0 = vector.load %arg0[%c0, %c0_0] : memref<16x32xf32, #tpu.memory_space<vmem>>, vector<16x32xf32>
    %1 = arith.truncf %0 : vector<16x32xf32> to vector<16x32xbf16>
    %2 = tpu.iota {dimensions = array<i32: 0>} : vector<16x16xi32>
    %c7_i32 = arith.constant 7 : i32
    %3 = vector.broadcast %c7_i32 : i32 to vector<16x16xi32>
    %4 = arith.andi %2, %3 : vector<16x16xi32>
    %cst = arith.constant 0.000000e+00 : f32
    %5 = vector.broadcast %cst : f32 to vector<22x16xf32>
    %c0_1 = arith.constant 0 : index
    %c0_2 = arith.constant 0 : index
    %6 = vector.load %arg4[%c0_1, %c0_2] : memref<22x16xf32, #tpu.memory_space<vmem>>, vector<22x16xf32>
    tpu.vector_store %arg4[%c0_1, %c0_2], %5 {strides = array<i32>} : memref<22x16xf32, #tpu.memory_space<vmem>>, vector<22x16xf32>,
    %c0_3 = arith.constant 0 : index
    %c0_4 = arith.constant 0 : index
    %7 = vector.load %arg1[%c0_3, %c0_4] : memref<256x32xbf16, #tpu.memory_space<vmem>>, vector<32x16xbf16>
    %cst_5 = arith.constant dense<0.000000e+00> : vector<16x16xf32>
    %8 = tpu.matmul %1, %7, %cst_5 {dimension_numbers = #tpu.dot_dimension_numbers<[1], [0], [0], [1], [0, 0, 1, 1], [], []>} : vector<16x32xbf16>, vector<32x16xbf16>, vector<16x16xf32> -> vector<16x16xf32>
    %c5_i32 = arith.constant 5 : i32
    %9 = vector.broadcast %c5_i32 : i32 to vector<16x16xi32>
    %10 = arith.cmpi slt, %4, %9 : vector<16x16xi32>
    %cst_6 = arith.constant 0.000000e+00 : f32
    %11 = vector.broadcast %cst_6 : f32 to vector<16x16xf32>
    %12 = arith.select %10, %8, %11 : vector<16x16xi1>, vector<16x16xf32>
    %c6 = arith.constant 6 : index
    %c0_7 = arith.constant 0 : index
    %13 = vector.load %arg4[%c6, %c0_7] : memref<22x16xf32, #tpu.memory_space<vmem>>, vector<16x16xf32>
    %14 = arith.addf %13, %12 : vector<16x16xf32>
    %c6_8 = arith.constant 6 : index
    %c0_9 = arith.constant 0 : index
    %15 = vector.load %arg4[%c6_8, %c0_9] : memref<22x16xf32, #tpu.memory_space<vmem>>, vector<16x16xf32>
    tpu.vector_store %arg4[%c6_8, %c0_9], %14 {strides = array<i32>} : memref<22x16xf32, #tpu.memory_space<vmem>>, vector<16x16xf32>,
    %c32 = arith.constant 32 : index
    %c0_10 = arith.constant 0 : index
    %16 = vector.load %arg1[%c32, %c0_10] : memref<256x32xbf16, #tpu.memory_space<vmem>>, vector<32x16xbf16>
    %cst_11 = arith.constant dense<0.000000e+00> : vector<16x16xf32>
    %17 = tpu.matmul %1, %16, %cst_11 {dimension_numbers = #tpu.dot_dimension_numbers<[1], [0], [0], [1], [0, 0, 1, 1], [], []>} : vector<16x32xbf16>, vector<32x16xbf16>, vector<16x16xf32> -> vector<16x16xf32>
    %c6_i32 = arith.constant 6 : i32
    %18 = vector.broadcast %c6_i32 : i32 to vector<16x16xi32>
    %19 = arith.cmpi slt, %4, %18 : vector<16x16xi32>
    %cst_12 = arith.constant 0.000000e+00 : f32
    %20 = vector.broadcast %cst_12 : f32 to vector<16x16xf32>
    %21 = arith.select %19, %17, %20 : vector<16x16xi1>, vector<16x16xf32>
    %c5 = arith.constant 5 : index
    %c0_13 = arith.constant 0 : index
    %22 = vector.load %arg4[%c5, %c0_13] : memref<22x16xf32, #tpu.memory_space<vmem>>, vector<16x16xf32>
    %23 = arith.addf %22, %21 : vector<16x16xf32>
    %c5_14 = arith.constant 5 : index
    %c0_15 = arith.constant 0 : index
    %24 = vector.load %arg4[%c5_14, %c0_15] : memref<22x16xf32, #tpu.memory_space<vmem>>, vector<16x16xf32>
    tpu.vector_store %arg4[%c5_14, %c0_15], %23 {strides = array<i32>} : memref<22x16xf32, #tpu.memory_space<vmem>>, vector<16x16xf32>,
    %c64 = arith.constant 64 : index
    %c0_16 = arith.constant 0 : index
    %25 = vector.load %arg1[%c64, %c0_16] : memref<256x32xbf16, #tpu.memory_space<vmem>>, vector<32x16xbf16>
    %cst_17 = arith.constant dense<0.000000e+00> : vector<16x16xf32>
    %26 = tpu.matmul %1, %25, %cst_17 {dimension_numbers = #tpu.dot_dimension_numbers<[1], [0], [0], [1], [0, 0, 1, 1], [], []>} : vector<16x32xbf16>, vector<32x16xbf16>, vector<16x16xf32> -> vector<16x16xf32>
    %c7_i32_18 = arith.constant 7 : i32
    %27 = vector.broadcast %c7_i32_18 : i32 to vector<16x16xi32>
    %28 = arith.cmpi slt, %4, %27 : vector<16x16xi32>
    %cst_19 = arith.constant 0.000000e+00 : f32
    %29 = vector.broadcast %cst_19 : f32 to vector<16x16xf32>
    %30 = arith.select %28, %26, %29 : vector<16x16xi1>, vector<16x16xf32>
    %c4 = arith.constant 4 : index
    %c0_20 = arith.constant 0 : index
    %31 = vector.load %arg4[%c4, %c0_20] : memref<22x16xf32, #tpu.memory_space<vmem>>, vector<16x16xf32>
    %32 = arith.addf %31, %30 : vector<16x16xf32>
    %c4_21 = arith.constant 4 : index
    %c0_22 = arith.constant 0 : index
    %33 = vector.load %arg4[%c4_21, %c0_22] : memref<22x16xf32, #tpu.memory_space<vmem>>, vector<16x16xf32>
    tpu.vector_store %arg4[%c4_21, %c0_22], %32 {strides = array<i32>} : memref<22x16xf32, #tpu.memory_space<vmem>>, vector<16x16xf32>,
    %c96 = arith.constant 96 : index
    %c0_23 = arith.constant 0 : index
    %34 = vector.load %arg1[%c96, %c0_23] : memref<256x32xbf16, #tpu.memory_space<vmem>>, vector<32x16xbf16>
    %cst_24 = arith.constant dense<0.000000e+00> : vector<16x16xf32>
    %35 = tpu.matmul %1, %34, %cst_24 {dimension_numbers = #tpu.dot_dimension_numbers<[1], [0], [0], [1], [0, 0, 1, 1], [], []>} : vector<16x32xbf16>, vector<32x16xbf16>, vector<16x16xf32> -> vector<16x16xf32>
    %c3 = arith.constant 3 : index
    %c0_25 = arith.constant 0 : index
    %36 = vector.load %arg4[%c3, %c0_25] : memref<22x16xf32, #tpu.memory_space<vmem>>, vector<16x16xf32>
    %37 = arith.addf %36, %35 : vector<16x16xf32>
    %c3_26 = arith.constant 3 : index
    %c0_27 = arith.constant 0 : index
    %38 = vector.load %arg4[%c3_26, %c0_27] : memref<22x16xf32, #tpu.memory_space<vmem>>, vector<16x16xf32>
    tpu.vector_store %arg4[%c3_26, %c0_27], %37 {strides = array<i32>} : memref<22x16xf32, #tpu.memory_space<vmem>>, vector<16x16xf32>,
    %c128 = arith.constant 128 : index
    %c0_28 = arith.constant 0 : index
    %39 = vector.load %arg1[%c128, %c0_28] : memref<256x32xbf16, #tpu.memory_space<vmem>>, vector<32x16xbf16>
    %cst_29 = arith.constant dense<0.000000e+00> : vector<16x16xf32>
    %40 = tpu.matmul %1, %39, %cst_29 {dimension_numbers = #tpu.dot_dimension_numbers<[1], [0], [0], [1], [0, 0, 1, 1], [], []>} : vector<16x32xbf16>, vector<32x16xbf16>, vector<16x16xf32> -> vector<16x16xf32>
    %c1_i32 = arith.constant 1 : i32
    %41 = vector.broadcast %c1_i32 : i32 to vector<16x16xi32>
    %42 = arith.cmpi sge, %4, %41 : vector<16x16xi32>
    %cst_30 = arith.constant 0.000000e+00 : f32
    %43 = vector.broadcast %cst_30 : f32 to vector<16x16xf32>
    %44 = arith.select %42, %40, %43 : vector<16x16xi1>, vector<16x16xf32>
    %c2 = arith.constant 2 : index
    %c0_31 = arith.constant 0 : index
    %45 = vector.load %arg4[%c2, %c0_31] : memref<22x16xf32, #tpu.memory_space<vmem>>, vector<16x16xf32>
    %46 = arith.addf %45, %44 : vector<16x16xf32>
    %c2_32 = arith.constant 2 : index
    %c0_33 = arith.constant 0 : index
    %47 = vector.load %arg4[%c2_32, %c0_33] : memref<22x16xf32, #tpu.memory_space<vmem>>, vector<16x16xf32>
    tpu.vector_store %arg4[%c2_32, %c0_33], %46 {strides = array<i32>} : memref<22x16xf32, #tpu.memory_space<vmem>>, vector<16x16xf32>,
    %c160 = arith.constant 160 : index
    %c0_34 = arith.constant 0 : index
    %48 = vector.load %arg1[%c160, %c0_34] : memref<256x32xbf16, #tpu.memory_space<vmem>>, vector<32x16xbf16>
    %cst_35 = arith.constant dense<0.000000e+00> : vector<16x16xf32>
    %49 = tpu.matmul %1, %48, %cst_35 {dimension_numbers = #tpu.dot_dimension_numbers<[1], [0], [0], [1], [0, 0, 1, 1], [], []>} : vector<16x32xbf16>, vector<32x16xbf16>, vector<16x16xf32> -> vector<16x16xf32>
    %c2_i32 = arith.constant 2 : i32
    %50 = vector.broadcast %c2_i32 : i32 to vector<16x16xi32>
    %51 = arith.cmpi sge, %4, %50 : vector<16x16xi32>
    %cst_36 = arith.constant 0.000000e+00 : f32
    %52 = vector.broadcast %cst_36 : f32 to vector<16x16xf32>
    %53 = arith.select %51, %49, %52 : vector<16x16xi1>, vector<16x16xf32>
    %c1 = arith.constant 1 : index
    %c0_37 = arith.constant 0 : index
    %54 = vector.load %arg4[%c1, %c0_37] : memref<22x16xf32, #tpu.memory_space<vmem>>, vector<16x16xf32>
    %55 = arith.addf %54, %53 : vector<16x16xf32>
    %c1_38 = arith.constant 1 : index
    %c0_39 = arith.constant 0 : index
    %56 = vector.load %arg4[%c1_38, %c0_39] : memref<22x16xf32, #tpu.memory_space<vmem>>, vector<16x16xf32>
    tpu.vector_store %arg4[%c1_38, %c0_39], %55 {strides = array<i32>} : memref<22x16xf32, #tpu.memory_space<vmem>>, vector<16x16xf32>,
    %c192 = arith.constant 192 : index
    %c0_40 = arith.constant 0 : index
    %57 = vector.load %arg1[%c192, %c0_40] : memref<256x32xbf16, #tpu.memory_space<vmem>>, vector<32x16xbf16>
    %cst_41 = arith.constant dense<0.000000e+00> : vector<16x16xf32>
    %58 = tpu.matmul %1, %57, %cst_41 {dimension_numbers = #tpu.dot_dimension_numbers<[1], [0], [0], [1], [0, 0, 1, 1], [], []>} : vector<16x32xbf16>, vector<32x16xbf16>, vector<16x16xf32> -> vector<16x16xf32>
    %c3_i32 = arith.constant 3 : i32
    %59 = vector.broadcast %c3_i32 : i32 to vector<16x16xi32>
    %60 = arith.cmpi sge, %4, %59 : vector<16x16xi32>
    %cst_42 = arith.constant 0.000000e+00 : f32
    %61 = vector.broadcast %cst_42 : f32 to vector<16x16xf32>
    %62 = arith.select %60, %58, %61 : vector<16x16xi1>, vector<16x16xf32>
    %c0_43 = arith.constant 0 : index
    %c0_44 = arith.constant 0 : index
    %63 = vector.load %arg4[%c0_43, %c0_44] : memref<22x16xf32, #tpu.memory_space<vmem>>, vector<16x16xf32>
    %64 = arith.addf %63, %62 : vector<16x16xf32>
    %c0_45 = arith.constant 0 : index
    %c0_46 = arith.constant 0 : index
    %65 = vector.load %arg4[%c0_45, %c0_46] : memref<22x16xf32, #tpu.memory_space<vmem>>, vector<16x16xf32>
    tpu.vector_store %arg4[%c0_45, %c0_46], %64 {strides = array<i32>} : memref<22x16xf32, #tpu.memory_space<vmem>>, vector<16x16xf32>,
    %c3_47 = arith.constant 3 : index
    %c0_48 = arith.constant 0 : index
    %66 = vector.load %arg4[%c3_47, %c0_48] : memref<22x16xf32, #tpu.memory_space<vmem>>, vector<16x16xf32>
    %c0_49 = arith.constant 0 : index
    %c0_50 = arith.constant 0 : index
    %67 = vector.load %arg2[%c0_49, %c0_50] : memref<3x32xf32, #tpu.memory_space<vmem>>, vector<1x16xf32>
    %68 = vector.broadcast %67 : vector<1x16xf32> to vector<16x16xf32>
    %69 = arith.addf %66, %68 : vector<16x16xf32>
    %70 = math.tanh %69 : vector<16x16xf32>
    %71 = arith.truncf %70 : vector<16x16xf32> to vector<16x16xbf16>
    %c224 = arith.constant 224 : index
    %c0_51 = arith.constant 0 : index
    %72 = vector.load %arg1[%c224, %c0_51] : memref<256x32xbf16, #tpu.memory_space<vmem>>, vector<16x8xbf16>
    %cst_52 = arith.constant dense<0.000000e+00> : vector<16x8xf32>
    %73 = tpu.matmul %71, %72, %cst_52 {dimension_numbers = #tpu.dot_dimension_numbers<[1], [0], [0], [1], [0, 0, 1, 1], [], []>} : vector<16x16xbf16>, vector<16x8xbf16>, vector<16x8xf32> -> vector<16x8xf32>
    %c1_53 = arith.constant 1 : index
    %c0_54 = arith.constant 0 : index
    %74 = vector.load %arg2[%c1_53, %c0_54] : memref<3x32xf32, #tpu.memory_space<vmem>>, vector<1x8xf32>
    %75 = vector.broadcast %74 : vector<1x8xf32> to vector<16x8xf32>
    %76 = arith.addf %73, %75 : vector<16x8xf32>
    %77 = math.tanh %76 : vector<16x8xf32>
    %78 = arith.truncf %77 : vector<16x8xf32> to vector<16x8xbf16>
    %c240 = arith.constant 240 : index
    %c0_55 = arith.constant 0 : index
    %79 = vector.load %arg1[%c240, %c0_55] : memref<256x32xbf16, #tpu.memory_space<vmem>>, vector<8x1xbf16>
    %cst_56 = arith.constant dense<0.000000e+00> : vector<16x1xf32>
    %80 = tpu.matmul %78, %79, %cst_56 {dimension_numbers = #tpu.dot_dimension_numbers<[1], [0], [0], [1], [0, 0, 1, 1], [], []>} : vector<16x8xbf16>, vector<8x1xbf16>, vector<16x1xf32> -> vector<16x1xf32>
    %c2_57 = arith.constant 2 : index
    %c0_58 = arith.constant 0 : index
    %81 = vector.load %arg2[%c2_57, %c0_58] : memref<3x32xf32, #tpu.memory_space<vmem>>, vector<1x1xf32>
    %82 = vector.broadcast %81 : vector<1x1xf32> to vector<16x1xf32>
    %83 = arith.addf %80, %82 : vector<16x1xf32>
    %c0_59 = arith.constant 0 : index
    %c0_60 = arith.constant 0 : index
    %84 = vector.load %arg3[%c0_59, %c0_60] : memref<16x1xf32, #tpu.memory_space<vmem>>, vector<16x1xf32>
    tpu.vector_store %arg3[%c0_59, %c0_60], %83 {strides = array<i32>} : memref<16x1xf32, #tpu.memory_space<vmem>>, vector<16x1xf32>,
    return
  }
}

</mosaic_0001>

<llo_original>
// kernel: scd_forward.1
$region0: #{scd_forward.1}
  #allocation0 [shape = 'u32[]', space=smem, size = 0x4, offset = 0x4, fixed_abs, tag = 'smem constant byte address 0x4 - core index']
  #allocation1 [shape = 'u32[72,128]{1,0:T(1,128)}', space=vmem, size = 0x9000, scoped, tag = 'internal scratch']
  #allocation2 [shape = 'f32[22,16]{1,0:T(8,128)}', space=vmem, size = 0x3000, scoped, tag = 'scratch operand']
  %s0 = inlined_call_operand.vmem [shape: f32[16,32], index: 0, kind: input, shape index: {}]
  %s1 = inlined_call_operand.vmem [shape: bf16[256,32], index: 1, kind: input, shape index: {}]
  %s2 = inlined_call_operand.vmem [shape: f32[3,32], index: 2, kind: input, shape index: {}]
  %s3 = inlined_call_operand.vmem [shape: f32[16,1], index: 3, kind: output, shape index: {}]
  %s4 = sld [smem:[#allocation0]]
  $region22: #{scd_forward.1} parent=0
    _
  %s6 = ssub.s32 1, %s4
  %s7 = scalar_select 0, %s6, %s4
  // Predicated region
  $region2: #{scd_forward.1} parent=0 // pred_check
    _
  $region3: #{scd_forward.1} parent=0 // pred_check_branch
    %9 = sbr.rel (0) target = $region5
  $region4: #{scd_forward.1} parent=0 // pred_region
    _
  $region5: #{scd_forward.1} parent=0 // pred_fallthru
    _
  // Predicated region
  $region6: #{scd_forward.1} parent=0 // pred_check
    _
  $region7: #{scd_forward.1} parent=0 // pred_check_branch
    %11 = sbr.rel (0) target = $region9
  $region8: #{scd_forward.1} parent=0 // pred_region
    _
  $region9: #{scd_forward.1} parent=0 // pred_fallthru
    _
  // Predicated region
  $region10: #{scd_forward.1} parent=0 // pred_check
    _
  $region11: #{scd_forward.1} parent=0 // pred_check_branch
    %13 = sbr.rel (0) target = $region13
  $region12: #{scd_forward.1} parent=0 // pred_region
    _
  $region13: #{scd_forward.1} parent=0 // pred_fallthru
    _
  %v15 = vld [vmem:[%s0] sm:$0xff]
  %v16 = vld [vmem:[%s0 + $0x8] sm:$0xff]
  %v17 = vpack.c.bf16 %v16, %v15
  %v18 = vlaneseq
  %v19 = vshrl.u32 %v18, 7
  %v20 = vadd.s32 %v19, 8
  %v21 = vand.u32 %v19, 7
  %v22 = vand.u32 %v20, 7
  %vm23 = vcmask 130048
  %24 = vst.msk [vmem:[#allocation2] sm:$0xff] %vm23, 0.0
  %25 = vst.msk [vmem:[#allocation2 + $0x8] sm:$0xff] %vm23, 0.0
  %vm26 = vcmask 128000
  %27 = vst.msk [vmem:[#allocation2 + $0x10] sm:$0x3f] %vm26, 0.0
  %v28 = vld [vmem:[%s1] sm:$0xf]
  %v29 = vld [vmem:[%s1 + $0x4] sm:$0xf]
  %v30 = vld [vmem:[%s1 + $0x8] sm:$0xf]
  %v31 = vld [vmem:[%s1 + $0xc] sm:$0xf]
  %v36 = vunpack.c.l.b16 %v28
  %v37 = vunpack.c.l.b16 %v29
  %v38 = vunpack.c.l.b16 %v30
  %v39 = vunpack.c.l.b16 %v31
  %v40 = vpack.c.b16 %v37, %v36
  %v41 = vpack.c.b16 %v39, %v38
  %vm44 = vcmask 261120
  %v46 = vsel %vm44, %v17, 0
  %48 = vmatpush.bf16.msra.mxu0 0
  %49 = vmatpush.bf16.msra.mxu0 0
  %50 = vmatpush.bf16.msra.mxu0 0
  %51 = vmatpush.bf16.msra.mxu0 0
  %52 = vmatpush.bf16.msra.mxu0 0
  %53 = vmatpush.bf16.msra.mxu0 0
  %54 = vmatpush.bf16.msra.mxu0 %v41
  %55 = vmatpush.bf16.msra.mxu0 %v40
  %56 = vmatmul.bf16.gmra.mxu0 %v46
  %v57 = vpop.f32.mrf.mxu0
  %v58 = vadd.f32 0.0, %v57
  %v59 = vpop.f32.mrf.mxu0
  %v60 = vadd.f32 0.0, %v59
  %61 = vdwg.mxu0
  %vm62 = vcmp.lt.s32.totalorder %v21, 5
  %vm63 = vcmp.lt.s32.totalorder %v22, 5
  %v64 = vsel %vm62, %v58, 0.0
  %v65 = vsel %vm63, %v60, 0.0
  %v66 = vld [vmem:[#allocation2 + $0x6] sm:$0xff]
  %v67 = vld [vmem:[#allocation2 + $0xe] sm:$0xff]
  %v68 = vadd.f32 %v66, %v64
  %v69 = vadd.f32 %v67, %v65
  %70 = vst.msk [vmem:[#allocation2 + $0x6] sm:$0xff] %vm23, %v68
  %71 = vst.msk [vmem:[#allocation2 + $0xe] sm:$0xff] %vm23, %v69
  %v72 = vld [vmem:[%s1 + $0x10] sm:$0xf]
  %v73 = vld [vmem:[%s1 + $0x14] sm:$0xf]
  %v74 = vld [vmem:[%s1 + $0x18] sm:$0xf]
  %v75 = vld [vmem:[%s1 + $0x1c] sm:$0xf]
  %v80 = vunpack.c.l.b16 %v72
  %v81 = vunpack.c.l.b16 %v73
  %v82 = vunpack.c.l.b16 %v74
  %v83 = vunpack.c.l.b16 %v75
  %v84 = vpack.c.b16 %v81, %v80
  %v85 = vpack.c.b16 %v83, %v82
  %88 = vmatpush.bf16.msra.mxu0 0
  %89 = vmatpush.bf16.msra.mxu0 0
  %90 = vmatpush.bf16.msra.mxu0 0
  %91 = vmatpush.bf16.msra.mxu0 0
  %92 = vmatpush.bf16.msra.mxu0 0
  %93 = vmatpush.bf16.msra.mxu0 0
  %94 = vmatpush.bf16.msra.mxu0 %v85
  %95 = vmatpush.bf16.msra.mxu0 %v84
  %96 = vmatmul.bf16.gmra.mxu0 %v46
  %v97 = vpop.f32.mrf.mxu0
  %v98 = vadd.f32 0.0, %v97
  %v99 = vpop.f32.mrf.mxu0
  %v100 = vadd.f32 0.0, %v99
  %101 = vdwg.mxu0
  %vm102 = vcmp.lt.s32.totalorder %v21, 6
  %vm103 = vcmp.lt.s32.totalorder %v22, 6
  %v104 = vsel %vm102, %v98, 0.0
  %v105 = vsel %vm103, %v100, 0.0
  %v106 = vld [vmem:[#allocation2 + $0x5] sm:$0xff]
  %v107 = vld [vmem:[#allocation2 + $0xd] sm:$0xff]
  %v108 = vadd.f32 %v106, %v104
  %v109 = vadd.f32 %v107, %v105
  %110 = vst.msk [vmem:[#allocation2 + $0x5] sm:$0xff] %vm23, %v108
  %111 = vst.msk [vmem:[#allocation2 + $0xd] sm:$0xff] %vm23, %v109
  %v112 = vld [vmem:[%s1 + $0x20] sm:$0xf]
  %v113 = vld [vmem:[%s1 + $0x24] sm:$0xf]
  %v114 = vld [vmem:[%s1 + $0x28] sm:$0xf]
  %v115 = vld [vmem:[%s1 + $0x2c] sm:$0xf]
  %v120 = vunpack.c.l.b16 %v112
  %v121 = vunpack.c.l.b16 %v113
  %v122 = vunpack.c.l.b16 %v114
  %v123 = vunpack.c.l.b16 %v115
  %v124 = vpack.c.b16 %v121, %v120
  %v125 = vpack.c.b16 %v123, %v122
  %128 = vmatpush.bf16.msra.mxu0 0
  %129 = vmatpush.bf16.msra.mxu0 0
  %130 = vmatpush.bf16.msra.mxu0 0
  %131 = vmatpush.bf16.msra.mxu0 0
  %132 = vmatpush.bf16.msra.mxu0 0
  %133 = vmatpush.bf16.msra.mxu0 0
  %134 = vmatpush.bf16.msra.mxu0 %v125
  %135 = vmatpush.bf16.msra.mxu0 %v124
  %136 = vmatmul.bf16.gmra.mxu0 %v46
  %v137 = vpop.f32.mrf.mxu0
  %v138 = vadd.f32 0.0, %v137
  %v139 = vpop.f32.mrf.mxu0
  %v140 = vadd.f32 0.0, %v139
  %141 = vdwg.mxu0
  %vm142 = vcmp.lt.s32.totalorder %v21, 7
  %vm143 = vcmp.lt.s32.totalorder %v22, 7
  %v144 = vsel %vm142, %v138, 0.0
  %v145 = vsel %vm143, %v140, 0.0
  %v146 = vld [vmem:[#allocation2 + $0x4] sm:$0xff]
  %v147 = vld [vmem:[#allocation2 + $0xc] sm:$0xff]
  %v148 = vadd.f32 %v146, %v144
  %v149 = vadd.f32 %v147, %v145
  %150 = vst.msk [vmem:[#allocation2 + $0x4] sm:$0xff] %vm23, %v148
  %151 = vst.msk [vmem:[#allocation2 + $0xc] sm:$0xff] %vm23, %v149
  %v152 = vld [vmem:[%s1 + $0x30] sm:$0xf]
  %v153 = vld [vmem:[%s1 + $0x34] sm:$0xf]
  %v154 = vld [vmem:[%s1 + $0x38] sm:$0xf]
  %v155 = vld [vmem:[%s1 + $0x3c] sm:$0xf]
  %v160 = vunpack.c.l.b16 %v152
  %v161 = vunpack.c.l.b16 %v153
  %v162 = vunpack.c.l.b16 %v154
  %v163 = vunpack.c.l.b16 %v155
  %v164 = vpack.c.b16 %v161, %v160
  %v165 = vpack.c.b16 %v163, %v162
  %168 = vmatpush.bf16.msra.mxu0 0
  %169 = vmatpush.bf16.msra.mxu0 0
  %170 = vmatpush.bf16.msra.mxu0 0
  %171 = vmatpush.bf16.msra.mxu0 0
  %172 = vmatpush.bf16.msra.mxu0 0
  %173 = vmatpush.bf16.msra.mxu0 0
  %174 = vmatpush.bf16.msra.mxu0 %v165
  %175 = vmatpush.bf16.msra.mxu0 %v164
  %176 = vmatmul.bf16.gmra.mxu0 %v46
  %v177 = vpop.f32.mrf.mxu0
  %v178 = vadd.f32 0.0, %v177
  %v179 = vpop.f32.mrf.mxu0
  %v180 = vadd.f32 0.0, %v179
  %181 = vdwg.mxu0
  %v182 = vld [vmem:[#allocation2 + $0x3] sm:$0xff]
  %v183 = vld [vmem:[#allocation2 + $0xb] sm:$0xff]
  %v184 = vadd.f32 %v182, %v178
  %v185 = vadd.f32 %v183, %v180
  %186 = vst.msk [vmem:[#allocation2 + $0x3] sm:$0xff] %vm23, %v184
  %187 = vst.msk [vmem:[#allocation2 + $0xb] sm:$0xff] %vm23, %v185
  %v188 = vld [vmem:[%s1 + $0x40] sm:$0xf]
  %v189 = vld [vmem:[%s1 + $0x44] sm:$0xf]
  %v190 = vld [vmem:[%s1 + $0x48] sm:$0xf]
  %v191 = vld [vmem:[%s1 + $0x4c] sm:$0xf]
  %v196 = vunpack.c.l.b16 %v188
  %v197 = vunpack.c.l.b16 %v189
  %v198 = vunpack.c.l.b16 %v190
  %v199 = vunpack.c.l.b16 %v191
  %v200 = vpack.c.b16 %v197, %v196
  %v201 = vpack.c.b16 %v199, %v198
  %204 = vmatpush.bf16.msra.mxu0 0
  %205 = vmatpush.bf16.msra.mxu0 0
  %206 = vmatpush.bf16.msra.mxu0 0
  %207 = vmatpush.bf16.msra.mxu0 0
  %208 = vmatpush.bf16.msra.mxu0 0
  %209 = vmatpush.bf16.msra.mxu0 0
  %210 = vmatpush.bf16.msra.mxu0 %v201
  %211 = vmatpush.bf16.msra.mxu0 %v200
  %212 = vmatmul.bf16.gmra.mxu0 %v46
  %v213 = vpop.f32.mrf.mxu0
  %v214 = vadd.f32 0.0, %v213
  %v215 = vpop.f32.mrf.mxu0
  %v216 = vadd.f32 0.0, %v215
  %217 = vdwg.mxu0
  %vm218 = vcmp.ge.s32.totalorder %v21, 1
  %vm219 = vcmp.ge.s32.totalorder %v22, 1
  %v220 = vsel %vm218, %v214, 0.0
  %v221 = vsel %vm219, %v216, 0.0
  %v222 = vld [vmem:[#allocation2 + $0x2] sm:$0xff]
  %v223 = vld [vmem:[#allocation2 + $0xa] sm:$0xff]
  %v224 = vadd.f32 %v222, %v220
  %v225 = vadd.f32 %v223, %v221
  %226 = vst.msk [vmem:[#allocation2 + $0x2] sm:$0xff] %vm23, %v224
  %227 = vst.msk [vmem:[#allocation2 + $0xa] sm:$0xff] %vm23, %v225
  %v228 = vld [vmem:[%s1 + $0x50] sm:$0xf]
  %v229 = vld [vmem:[%s1 + $0x54] sm:$0xf]
  %v230 = vld [vmem:[%s1 + $0x58] sm:$0xf]
  %v231 = vld [vmem:[%s1 + $0x5c] sm:$0xf]
  %v236 = vunpack.c.l.b16 %v228
  %v237 = vunpack.c.l.b16 %v229
  %v238 = vunpack.c.l.b16 %v230
  %v239 = vunpack.c.l.b16 %v231
  %v240 = vpack.c.b16 %v237, %v236
  %v241 = vpack.c.b16 %v239, %v238
  %244 = vmatpush.bf16.msra.mxu0 0
  %245 = vmatpush.bf16.msra.mxu0 0
  %246 = vmatpush.bf16.msra.mxu0 0
  %247 = vmatpush.bf16.msra.mxu0 0
  %248 = vmatpush.bf16.msra.mxu0 0
  %249 = vmatpush.bf16.msra.mxu0 0
  %250 = vmatpush.bf16.msra.mxu0 %v241
  %251 = vmatpush.bf16.msra.mxu0 %v240
  %252 = vmatmul.bf16.gmra.mxu0 %v46
  %v253 = vpop.f32.mrf.mxu0
  %v254 = vadd.f32 0.0, %v253
  %v255 = vpop.f32.mrf.mxu0
  %v256 = vadd.f32 0.0, %v255
  %257 = vdwg.mxu0
  %vm258 = vcmp.ge.s32.totalorder %v21, 2
  %vm259 = vcmp.ge.s32.totalorder %v22, 2
  %v260 = vsel %vm258, %v254, 0.0
  %v261 = vsel %vm259, %v256, 0.0
  %v262 = vld [vmem:[#allocation2 + $0x1] sm:$0xff]
  %v263 = vld [vmem:[#allocation2 + $0x9] sm:$0xff]
  %v264 = vadd.f32 %v262, %v260
  %v265 = vadd.f32 %v263, %v261
  %266 = vst.msk [vmem:[#allocation2 + $0x1] sm:$0xff] %vm23, %v264
  %267 = vst.msk [vmem:[#allocation2 + $0x9] sm:$0xff] %vm23, %v265
  %v268 = vld [vmem:[%s1 + $0x60] sm:$0xf]
  %v269 = vld [vmem:[%s1 + $0x64] sm:$0xf]
  %v270 = vld [vmem:[%s1 + $0x68] sm:$0xf]
  %v271 = vld [vmem:[%s1 + $0x6c] sm:$0xf]
  %v276 = vunpack.c.l.b16 %v268
  %v277 = vunpack.c.l.b16 %v269
  %v278 = vunpack.c.l.b16 %v270
  %v279 = vunpack.c.l.b16 %v271
  %v280 = vpack.c.b16 %v277, %v276
  %v281 = vpack.c.b16 %v279, %v278
  %284 = vmatpush.bf16.msra.mxu0 0
  %285 = vmatpush.bf16.msra.mxu0 0
  %286 = vmatpush.bf16.msra.mxu0 0
  %287 = vmatpush.bf16.msra.mxu0 0
  %288 = vmatpush.bf16.msra.mxu0 0
  %289 = vmatpush.bf16.msra.mxu0 0
  %290 = vmatpush.bf16.msra.mxu0 %v281
  %291 = vmatpush.bf16.msra.mxu0 %v280
  %292 = vmatmul.bf16.gmra.mxu0 %v46
  %v293 = vpop.f32.mrf.mxu0
  %v294 = vadd.f32 0.0, %v293
  %v295 = vpop.f32.mrf.mxu0
  %v296 = vadd.f32 0.0, %v295
  %297 = vdwg.mxu0
  %vm298 = vcmp.ge.s32.totalorder %v21, 3
  %vm299 = vcmp.ge.s32.totalorder %v22, 3
  %v300 = vsel %vm298, %v294, 0.0
  %v301 = vsel %vm299, %v296, 0.0
  %v302 = vld [vmem:[#allocation2] sm:$0xff]
  %v303 = vld [vmem:[#allocation2 + $0x8] sm:$0xff]
  %v304 = vadd.f32 %v302, %v300
  %v305 = vadd.f32 %v303, %v301
  %306 = vst.msk [vmem:[#allocation2] sm:$0xff] %vm23, %v304
  %307 = vst.msk [vmem:[#allocation2 + $0x8] sm:$0xff] %vm23, %v305
  %v308 = vld [vmem:[#allocation2 + $0x3] sm:$0xff]
  %v309 = vld [vmem:[#allocation2 + $0xb] sm:$0xff]
  %v310 = vld [vmem:[%s2] sm:$0x1]
  %v311 = vperm.slane %v310, 0
  %v312 = vadd.f32 %v308, %v311
  %v313 = vadd.f32 %v309, %v311
  %v314 = vtanh.pop %v312
  %v315 = vtanh.pop %v313
  %v316 = vpack.c.bf16 %v315, %v314
  %v317 = vld [vmem:[%s1 + $0x70] sm:$0xf]
  %v318 = vld [vmem:[%s1 + $0x74] sm:$0xf]
  %v319 = vld [vmem:[%s2 + $0x1] sm:$0x1]
  %v320 = vperm.slane %v319, 0
  %v323 = vunpack.c.l.b16 %v317
  %v324 = vunpack.c.l.b16 %v318
  %v325 = vpack.c.b16 %v324, %v323
  %v328 = vsel %vm23, %v316, 0
  %330 = vmatpush.bf16.msra.mxu0 0
  %331 = vmatpush.bf16.msra.mxu0 0
  %332 = vmatpush.bf16.msra.mxu0 0
  %333 = vmatpush.bf16.msra.mxu0 0
  %334 = vmatpush.bf16.msra.mxu0 0
  %335 = vmatpush.bf16.msra.mxu0 0
  %336 = vmatpush.bf16.msra.mxu0 0
  %337 = vmatpush.bf16.msra.mxu0 %v325
  %338 = vmatmul.bf16.gmra.mxu0 %v328
  %v339 = vpop.f32.mrf.mxu0
  %v340 = vadd.f32 %v320, %v339
  %v341 = vpop.f32.mrf.mxu0
  %v342 = vadd.f32 %v320, %v341
  %343 = vdwg.mxu0
  %v344 = vtanh.pop %v340
  %v345 = vtanh.pop %v342
  %v346 = vpack.c.bf16 %v345, %v344
  %v347 = vld [vmem:[%s1 + $0x78] sm:$0xf]
  %v348 = vld [vmem:[%s2 + $0x2] sm:$0x1]
  %v349 = vperm.slane %v348, 0
  %vm350 = vcmask 64512
  %v352 = vsel %vm350, %v346, 0
  %vm354 = vcmask 1043456
  %v356 = vsel %vm354, %v347, 0
  %358 = vmatpush.bf16.msra.mxu0 0
  %359 = vmatpush.bf16.msra.mxu0 0
  %360 = vmatpush.bf16.msra.mxu0 0
  %361 = vmatpush.bf16.msra.mxu0 0
  %362 = vmatpush.bf16.msra.mxu0 0
  %363 = vmatpush.bf16.msra.mxu0 0
  %364 = vmatpush.bf16.msra.mxu0 0
  %365 = vmatpush.bf16.msra.mxu0 %v356
  %366 = vmatmul.bf16.gmra.mxu0 %v352
  %v367 = vpop.f32.mrf.mxu0
  %v368 = vadd.f32 %v349, %v367
  %v369 = vpop.f32.mrf.mxu0
  %v370 = vadd.f32 %v349, %v369
  %371 = vdwg.mxu0
  %vm372 = vcmask 7168
  %373 = vst.msk [vmem:[%s3] sm:$0xff] %vm372, %v368
  %374 = vst.msk [vmem:[%s3 + $0x8] sm:$0xff] %vm372, %v370
  // Predicated region
  $region14: #{scd_forward.1} parent=0 // pred_check
    _
  $region15: #{scd_forward.1} parent=0 // pred_check_branch
    %376 = sbr.rel (0) target = $region17
  $region16: #{scd_forward.1} parent=0 // pred_region
    _
  $region17: #{scd_forward.1} parent=0 // pred_fallthru
    _
  // Predicated region
  $region18: #{scd_forward.1} parent=0 // pred_check
    _
  $region19: #{scd_forward.1} parent=0 // pred_check_branch
    %378 = sbr.rel (0) target = $region21
  $region20: #{scd_forward.1} parent=0 // pred_region
    _
  $region21: #{scd_forward.1} parent=0 // pred_fallthru
    _

</llo_original>
